<compile_context>
chip_gen: v7x
topology: tpu7x:2x2x1
jax: 0.10.0
libtpu: 0.0.40
codegen_flags: <defaults>
</compile_context>

<pallas_src>
import math

import jax
import jax.numpy as jnp
from jax.experimental import pallas as pl
from jax.experimental.pallas import tpu as pltpu


# ---------------------------------------------------------------------------
# Pallas kernels
# ---------------------------------------------------------------------------
def _noisy_linear_train_kernel(x_ref, wmu_ref, wsig_ref, eps_in_ref,
                               eps_out_ref, bmu_ref, bsig_ref, o_ref):
    """Grid = (N_tiles [parallel], K_tiles [arbitrary, reduction last])."""
    j = pl.program_id(0)
    k = pl.program_id(1)
    tk, tn = wmu_ref.shape          # weight tile is [tk, tn], pre-transposed

    @pl.when(k == 0)
    def _init():
        o_ref[...] = jnp.zeros_like(o_ref)

    k_off = pl.multiple_of(k * tk, 128)
    n_off = pl.multiple_of(j * tn, 128)

    x = x_ref[:, pl.ds(k_off, tk)]               # [B, tk]  f32, VMEM-resident
    eps_in = eps_in_ref[:, pl.ds(k_off, tk)]     # [1, tk]
    eps_out = eps_out_ref[:, pl.ds(n_off, tn)]   # [1, tn]

    wdt = wmu_ref.dtype                          # bf16 weights, f32 accumulate
    # mu branch: x @ Wmu   (weights already [K, N] -> no in-kernel transpose)
    acc = jnp.dot(x.astype(wdt), wmu_ref[...],
                  preferred_element_type=jnp.float32)
    # sigma branch via rank-1 factorised noise: eps_out * ((x * eps_in) @ Wsig)
    xs = (x * eps_in).astype(wdt)
    acc += eps_out * jnp.dot(xs, wsig_ref[...],
                             preferred_element_type=jnp.float32)
    o_ref[...] += acc                            # f32 output block, resident over k

    @pl.when(k == pl.num_programs(1) - 1)
    def _finalize():
        b = bmu_ref[:, pl.ds(n_off, tn)] + bsig_ref[:, pl.ds(n_off, tn)] * eps_out
        o_ref[...] += b


def _noisy_linear_eval_kernel(x_ref, wmu_ref, bmu_ref, o_ref):
    j = pl.program_id(0)
    k = pl.program_id(1)
    tk, tn = wmu_ref.shape

    @pl.when(k == 0)
    def _init():
        o_ref[...] = jnp.zeros_like(o_ref)

    k_off = pl.multiple_of(k * tk, 128)
    n_off = pl.multiple_of(j * tn, 128)

    x = x_ref[:, pl.ds(k_off, tk)]
    o_ref[...] += jnp.dot(x.astype(wmu_ref.dtype), wmu_ref[...],
                          preferred_element_type=jnp.float32)

    @pl.when(k == pl.num_programs(1) - 1)
    def _finalize():
        o_ref[...] += bmu_ref[:, pl.ds(n_off, tn)]


# ---------------------------------------------------------------------------
# Layout helpers (one-time parameter plumbing, NOT per-call work)
# ---------------------------------------------------------------------------
def _round_up(x, m):
    return ((x + m - 1) // m) * m


def _pick_tile(dim_padded, target):
    """Largest multiple of 128 that divides dim_padded and is <= target."""
    t = max(128, (min(target, dim_padded) // 128) * 128)
    while dim_padded % t:
        t -= 128
    return max(t, 128)


def _pad_row(v, n_pad):
    """[n] f32 -> [1, n_pad] f32 (zero padded)."""
    v = jnp.asarray(v, jnp.float32).reshape(1, -1)
    return jnp.pad(v, ((0, 0), (0, n_pad - v.shape[1])))


def prepare_noisy_linear_weights(params, weight_dtype=jnp.bfloat16):
    """One-time, weight-sized work: transpose to [in, out], pad feature dims to
    multiples of 128, cast weights to bf16 for halved HBM traffic."""
    out_f, in_f = params["weight_mu"].shape
    k_pad, n_pad = _round_up(in_f, 128), _round_up(out_f, 128)

    def pad_t(w):       # [out, in] -> [K_pad, N_pad]
        return jnp.pad(w.T, ((0, k_pad - in_f),
                             (0, n_pad - out_f))).astype(weight_dtype)

    return dict(
        in_features=in_f, out_features=out_f, k_pad=k_pad, n_pad=n_pad,
        weight_mu_t=pad_t(params["weight_mu"]),
        weight_sigma_t=pad_t(params["weight_sigma"]),
        bias_mu=_pad_row(params["bias_mu"], n_pad),
        bias_sigma=_pad_row(params["bias_sigma"], n_pad),
    )


def refresh_noisy_linear_noise(prep, eps_in, eps_out):
    """Cheap per-reset_noise() refresh: O(in+out) work, no weight-sized traffic,
    and the dense outer(eps_out, eps_in) matrix is never materialized."""
    new = dict(prep)
    new["eps_in"] = _pad_row(eps_in, prep["k_pad"])
    new["eps_out"] = _pad_row(eps_out, prep["n_pad"])
    return new


# ---------------------------------------------------------------------------
# Forward wrapper
# ---------------------------------------------------------------------------
def noisy_linear_forward(x, prep, training=True, *, tile_n=1024, tile_k=1024):
    """x: [B, in_features], prep: prepare_noisy_linear_weights (+ refresh)."""
    x = x.astype(jnp.float32)
    B, in_f = x.shape
    assert in_f == prep["in_features"]
    out_f, k_pad, n_pad = prep["out_features"], prep["k_pad"], prep["n_pad"]

    # Guarantee >= 2 tiles on the parallel N axis whenever possible so both
    # v7x TensorCores get work (no-op on v5e / v6e single-TC chips).
    tn_target = min(tile_n, n_pad // 2) if n_pad >= 256 else tile_n
    tn = _pick_tile(n_pad, tn_target)
    tk = _pick_tile(k_pad, tile_k)
    grid = (n_pad // tn, k_pad // tk)     # N tiles (parallel), K reduction last

    x_p = jnp.pad(x, ((0, 0), (0, k_pad - in_f)))        # [B, K_pad]

    # Resident small operands (constant block index -> fetched once).
    x_spec = pl.BlockSpec((B, k_pad), lambda j, k: (0, 0))
    row_k = pl.BlockSpec((1, k_pad), lambda j, k: (0, 0))
    row_n = pl.BlockSpec((1, n_pad), lambda j, k: (0, 0))
    # The only pipelined HBM streams: the two pre-transposed weight matrices.
    w_spec = pl.BlockSpec((tk, tn), lambda j, k: (k, j))
    o_spec = pl.BlockSpec((B, tn), lambda j, k: (0, j))   # resident across k

    cparams = pltpu.CompilerParams(
        dimension_semantics=("parallel", "arbitrary"))
    out_shape = jax.ShapeDtypeStruct((B, n_pad), jnp.float32)

    if training:
        y = pl.pallas_call(
            _noisy_linear_train_kernel,
            out_shape=out_shape,
            grid_spec=pltpu.PrefetchScalarGridSpec(
                num_scalar_prefetch=0,
                grid=grid,
                in_specs=[x_spec, w_spec, w_spec, row_k, row_n, row_n, row_n],
                out_specs=o_spec),
            compiler_params=cparams,
        )(x_p, prep["weight_mu_t"], prep["weight_sigma_t"],
          prep["eps_in"], prep["eps_out"], prep["bias_mu"], prep["bias_sigma"])
    else:
        y = pl.pallas_call(
            _noisy_linear_eval_kernel,
            out_shape=out_shape,
            grid_spec=pltpu.PrefetchScalarGridSpec(
                num_scalar_prefetch=0,
                grid=grid,
                in_specs=[x_spec, w_spec, row_n],
                out_specs=o_spec),
            compiler_params=cparams,
        )(x_p, prep["weight_mu_t"], prep["bias_mu"])

    return y[:, :out_f]


# ---------------------------------------------------------------------------
# Deterministic parameter / noise initialization (mirrors the PyTorch module)
# ---------------------------------------------------------------------------
def _scale_noise(key, n):
    # factorised Gaussian noise: f(z) = sign(z) * sqrt(|z|)
    z = jax.random.normal(key, (n,), jnp.float32)
    return jnp.sign(z) * jnp.sqrt(jnp.abs(z))


def init_noisy_linear(key, in_features, out_features, std_init=0.4):
    k_wmu, k_bmu, k_ein, k_eout = jax.random.split(key, 4)
    mu_range = 1.0 / math.sqrt(in_features)

    weight_mu = jax.random.uniform(
        k_wmu, (out_features, in_features), jnp.float32, -mu_range, mu_range)
    weight_sigma = jnp.full((out_features, in_features),
                            std_init / math.sqrt(in_features), jnp.float32)
    bias_mu = jax.random.uniform(
        k_bmu, (out_features,), jnp.float32, -mu_range, mu_range)
    bias_sigma = jnp.full((out_features,),
                          std_init / math.sqrt(out_features), jnp.float32)

    eps_in = _scale_noise(k_ein, in_features)
    eps_out = _scale_noise(k_eout, out_features)

    return dict(weight_mu=weight_mu, weight_sigma=weight_sigma,
                bias_mu=bias_mu, bias_sigma=bias_sigma,
                eps_in=eps_in, eps_out=eps_out,
                # dense buffers kept only for the PyTorch-equivalent reference
                weight_epsilon=jnp.outer(eps_out, eps_in),
                bias_epsilon=eps_out)


def _reference(x, params, training):
    if training:
        w = params["weight_mu"] + params["weight_sigma"] * params["weight_epsilon"]
        b = params["bias_mu"] + params["bias_sigma"] * params["bias_epsilon"]
    else:
        w, b = params["weight_mu"], params["bias_mu"]
    return jnp.dot(x, w.T, precision=jax.lax.Precision.HIGHEST) + b


# ---------------------------------------------------------------------------
if __name__ == "__main__":
    key = jax.random.PRNGKey(0)
    k1, k2, k3, k4, k5 = jax.random.split(key, 5)

    # bf16 weight storage -> loosened tolerance vs. the exact f32 reference.
    TOL = dict(atol=5e-2, rtol=5e-2)

    # --- case 1: module-typical small shapes (features padded 32->128, 64->128)
    B, IN_F, OUT_F = 8, 32, 64
    params = init_noisy_linear(k1, IN_F, OUT_F, std_init=0.4)
    prep = refresh_noisy_linear_noise(
        prepare_noisy_linear_weights(params), params["eps_in"], params["eps_out"])
    x = jax.random.normal(k2, (B, IN_F), jnp.float32)

    y_train = jax.block_until_ready(noisy_linear_forward(x, prep, training=True))
    y_eval = jax.block_until_ready(noisy_linear_forward(x, prep, training=False))
    assert y_train.shape == (B, OUT_F) and y_eval.shape == (B, OUT_F)
    assert jnp.allclose(y_train, _reference(x, params, True), **TOL)
    assert jnp.allclose(y_eval, _reference(x, params, False), **TOL)

    # --- case 1b: cheap noise reset (no weight-sized re-prep), as in NoisyNet
    new_eps_in = _scale_noise(k4, IN_F)
    new_eps_out = _scale_noise(k5, OUT_F)
    prep_r = refresh_noisy_linear_noise(prep, new_eps_in, new_eps_out)
    params_r = dict(params, eps_in=new_eps_in, eps_out=new_eps_out,
                    weight_epsilon=jnp.outer(new_eps_out, new_eps_in),
                    bias_epsilon=new_eps_out)
    y_r = jax.block_until_ready(noisy_linear_forward(x, prep_r, training=True))
    assert jnp.allclose(y_r, _reference(x, params_r, True), **TOL)

    # --- case 2: exercise the multi-tile pipelined grid + padding path
    IN2, OUT2 = 300, 250          # pads to K=384, N=256; 128 tiles -> grid (2, 3)
    params2 = init_noisy_linear(k3, IN2, OUT2, std_init=0.4)
    prep2 = refresh_noisy_linear_noise(
        prepare_noisy_linear_weights(params2),
        params2["eps_in"], params2["eps_out"])
    x2 = jax.random.normal(k2, (B, IN2), jnp.float32)

    y2_train = jax.block_until_ready(
        noisy_linear_forward(x2, prep2, training=True, tile_n=128, tile_k=128))
    y2_eval = jax.block_until_ready(
        noisy_linear_forward(x2, prep2, training=False, tile_n=128, tile_k=128))
    assert y2_train.shape == (B, OUT2) and y2_eval.shape == (B, OUT2)
    assert jnp.allclose(y2_train, _reference(x2, params2, True), **TOL)
    assert jnp.allclose(y2_eval, _reference(x2, params2, False), **TOL)

    print("KERNEL_OK")
</pallas_src>

<mosaic_0001>
module attributes {stable_mosaic.version = 11 : i64} {
  func.func @_noisy_linear_train_kernel(%arg0: i32, %arg1: i32, %arg2: memref<8x128xf32, #tpu.memory_space<vmem>>, %arg3: memref<128x128xbf16, #tpu.memory_space<vmem>>, %arg4: memref<128x128xbf16, #tpu.memory_space<vmem>>, %arg5: memref<1x128xf32, #tpu.memory_space<vmem>>, %arg6: memref<1x128xf32, #tpu.memory_space<vmem>>, %arg7: memref<1x128xf32, #tpu.memory_space<vmem>>, %arg8: memref<1x128xf32, #tpu.memory_space<vmem>>, %arg9: memref<8x128xf32, #tpu.memory_space<vmem>>) attributes {dimension_semantics = [#tpu.dimension_semantics<parallel>, #tpu.dimension_semantics<arbitrary>], iteration_bounds = array<i64: 1, 1>, scalar_prefetch = 0 : i64, scratch_operands = 0 : i64, tpu.core_type = #tpu.core_type<tc>, window_params = [{pipeline_mode = #tpu.pipeline_mode<synchronous>, transform_indices = @transform_0, window_bounds = array<i64: 8, 128>}, {transform_indices = @transform_1, window_bounds = array<i64: 128, 128>}, {transform_indices = @transform_2, window_bounds = array<i64: 128, 128>}, {pipeline_mode = #tpu.pipeline_mode<synchronous>, transform_indices = @transform_3, window_bounds = array<i64: 1, 128>}, {pipeline_mode = #tpu.pipeline_mode<synchronous>, transform_indices = @transform_4, window_bounds = array<i64: 1, 128>}, {pipeline_mode = #tpu.pipeline_mode<synchronous>, transform_indices = @transform_5, window_bounds = array<i64: 1, 128>}, {pipeline_mode = #tpu.pipeline_mode<synchronous>, transform_indices = @transform_6, window_bounds = array<i64: 1, 128>}, {transform_indices = @transform_7, window_bounds = array<i64: 8, 128>}]} {
    %c0_i32 = arith.constant 0 : i32
    %0 = arith.cmpi eq, %arg1, %c0_i32 : i32
    %1 = arith.extui %0 : i1 to i32
    %c0_i32_0 = arith.constant 0 : i32
    %2 = arith.cmpi ne, %1, %c0_i32_0 : i32
    scf.if %2 {
      %cst_15 = arith.constant 0.000000e+00 : f32
      %30 = vector.broadcast %cst_15 : f32 to vector<8x128xf32>
      %c0_16 = arith.constant 0 : index
      %c0_17 = arith.constant 0 : index
      %31 = vector.load %arg9[%c0_16, %c0_17] : memref<8x128xf32, #tpu.memory_space<vmem>>, vector<8x128xf32>
      tpu.vector_store %arg9[%c0_16, %c0_17], %30 {strides = array<i32>} : memref<8x128xf32, #tpu.memory_space<vmem>>, vector<8x128xf32>,
    } else {
    }
    %c128_i32 = arith.constant 128 : i32
    %3 = arith.muli %arg1, %c128_i32 : i32
    %4 = tpu.assume_multiple %3, 128 : i32
    %c128_i32_1 = arith.constant 128 : i32
    %5 = arith.muli %arg0, %c128_i32_1 : i32
    %6 = tpu.assume_multiple %5, 128 : i32
    %c0 = arith.constant 0 : index
    %7 = arith.index_cast %4 : i32 to index
    %8 = vector.load %arg2[%c0, %7] : memref<8x128xf32, #tpu.memory_space<vmem>>, vector<8x128xf32>
    %c0_2 = arith.constant 0 : index
    %9 = arith.index_cast %4 : i32 to index
    %10 = vector.load %arg5[%c0_2, %9] : memref<1x128xf32, #tpu.memory_space<vmem>>, vector<1x128xf32>
    %c0_3 = arith.constant 0 : index
    %11 = arith.index_cast %6 : i32 to index
    %12 = vector.load %arg6[%c0_3, %11] : memref<1x128xf32, #tpu.memory_space<vmem>>, vector<1x128xf32>
    %13 = arith.truncf %8 : vector<8x128xf32> to vector<8x128xbf16>
    %c0_4 = arith.constant 0 : index
    %c0_5 = arith.constant 0 : index
    %14 = vector.load %arg3[%c0_4, %c0_5] : memref<128x128xbf16, #tpu.memory_space<vmem>>, vector<128x128xbf16>
    %cst = arith.constant dense<0.000000e+00> : vector<8x128xf32>
    %15 = tpu.matmul %13, %14, %cst {dimension_numbers = #tpu.dot_dimension_numbers<[1], [0], [0], [1], [0, 0, 1, 1], [], []>} : vector<8x128xbf16>, vector<128x128xbf16>, vector<8x128xf32> -> vector<8x128xf32>
    %16 = vector.broadcast %10 : vector<1x128xf32> to vector<8x128xf32>
    %17 = arith.mulf %8, %16 : vector<8x128xf32>
    %18 = arith.truncf %17 : vector<8x128xf32> to vector<8x128xbf16>
    %c0_6 = arith.constant 0 : index
    %c0_7 = arith.constant 0 : index
    %19 = vector.load %arg4[%c0_6, %c0_7] : memref<128x128xbf16, #tpu.memory_space<vmem>>, vector<128x128xbf16>
    %cst_8 = arith.constant dense<0.000000e+00> : vector<8x128xf32>
    %20 = tpu.matmul %18, %19, %cst_8 {dimension_numbers = #tpu.dot_dimension_numbers<[1], [0], [0], [1], [0, 0, 1, 1], [], []>} : vector<8x128xbf16>, vector<128x128xbf16>, vector<8x128xf32> -> vector<8x128xf32>
    %21 = vector.broadcast %12 : vector<1x128xf32> to vector<8x128xf32>
    %22 = arith.mulf %21, %20 : vector<8x128xf32>
    %23 = arith.addf %15, %22 : vector<8x128xf32>
    %c0_9 = arith.constant 0 : index
    %c0_10 = arith.constant 0 : index
    %24 = vector.load %arg9[%c0_9, %c0_10] : memref<8x128xf32, #tpu.memory_space<vmem>>, vector<8x128xf32>
    %25 = arith.addf %24, %23 : vector<8x128xf32>
    %c0_11 = arith.constant 0 : index
    %c0_12 = arith.constant 0 : index
    %26 = vector.load %arg9[%c0_11, %c0_12] : memref<8x128xf32, #tpu.memory_space<vmem>>, vector<8x128xf32>
    tpu.vector_store %arg9[%c0_11, %c0_12], %25 {strides = array<i32>} : memref<8x128xf32, #tpu.memory_space<vmem>>, vector<8x128xf32>,
    %c0_i32_13 = arith.constant 0 : i32
    %27 = arith.cmpi eq, %arg1, %c0_i32_13 : i32
    %28 = arith.extui %27 : i1 to i32
    %c0_i32_14 = arith.constant 0 : i32
    %29 = arith.cmpi ne, %28, %c0_i32_14 : i32
    scf.if %29 {
      %c0_15 = arith.constant 0 : index
      %30 = arith.index_cast %6 : i32 to index
      %31 = vector.load %arg7[%c0_15, %30] : memref<1x128xf32, #tpu.memory_space<vmem>>, vector<1x128xf32>
      %c0_16 = arith.constant 0 : index
      %32 = arith.index_cast %6 : i32 to index
      %33 = vector.load %arg8[%c0_16, %32] : memref<1x128xf32, #tpu.memory_space<vmem>>, vector<1x128xf32>
      %34 = arith.mulf %33, %12 : vector<1x128xf32>
      %35 = arith.addf %31, %34 : vector<1x128xf32>
      %c0_17 = arith.constant 0 : index
      %c0_18 = arith.constant 0 : index
      %36 = vector.load %arg9[%c0_17, %c0_18] : memref<8x128xf32, #tpu.memory_space<vmem>>, vector<8x128xf32>
      %37 = vector.broadcast %35 : vector<1x128xf32> to vector<8x128xf32>
      %38 = arith.addf %36, %37 : vector<8x128xf32>
      %c0_19 = arith.constant 0 : index
      %c0_20 = arith.constant 0 : index
      %39 = vector.load %arg9[%c0_19, %c0_20] : memref<8x128xf32, #tpu.memory_space<vmem>>, vector<8x128xf32>
      tpu.vector_store %arg9[%c0_19, %c0_20], %38 {strides = array<i32>} : memref<8x128xf32, #tpu.memory_space<vmem>>, vector<8x128xf32>,
    } else {
    }
    return
  }
  func.func @transform_0(%arg0: i32, %arg1: i32) -> (i32, i32) {
    %c0_i32 = arith.constant 0 : i32
    %c0_i32_0 = arith.constant 0 : i32
    %c0_i32_1 = arith.constant 0 : i32
    return %c0_i32, %c0_i32_0 : i32, i32
  }
  func.func @transform_1(%arg0: i32, %arg1: i32) -> (i32, i32) {
    %c0_i32 = arith.constant 0 : i32
    return %arg1, %arg0 : i32, i32
  }
  func.func @transform_2(%arg0: i32, %arg1: i32) -> (i32, i32) {
    %c0_i32 = arith.constant 0 : i32
    return %arg1, %arg0 : i32, i32
  }
  func.func @transform_3(%arg0: i32, %arg1: i32) -> (i32, i32) {
    %c0_i32 = arith.constant 0 : i32
    %c0_i32_0 = arith.constant 0 : i32
    %c0_i32_1 = arith.constant 0 : i32
    return %c0_i32, %c0_i32_0 : i32, i32
  }
  func.func @transform_4(%arg0: i32, %arg1: i32) -> (i32, i32) {
    %c0_i32 = arith.constant 0 : i32
    %c0_i32_0 = arith.constant 0 : i32
    %c0_i32_1 = arith.constant 0 : i32
    return %c0_i32, %c0_i32_0 : i32, i32
  }
  func.func @transform_5(%arg0: i32, %arg1: i32) -> (i32, i32) {
    %c0_i32 = arith.constant 0 : i32
    %c0_i32_0 = arith.constant 0 : i32
    %c0_i32_1 = arith.constant 0 : i32
    return %c0_i32, %c0_i32_0 : i32, i32
  }
  func.func @transform_6(%arg0: i32, %arg1: i32) -> (i32, i32) {
    %c0_i32 = arith.constant 0 : i32
    %c0_i32_0 = arith.constant 0 : i32
    %c0_i32_1 = arith.constant 0 : i32
    return %c0_i32, %c0_i32_0 : i32, i32
  }
  func.func @transform_7(%arg0: i32, %arg1: i32) -> (i32, i32) {
    %c0_i32 = arith.constant 0 : i32
    %c0_i32_0 = arith.constant 0 : i32
    return %c0_i32, %arg0 : i32, i32
  }
}

</mosaic_0001>

<llo_original>
// kernel: tpu_custom_call.1
$region0: #{tpu_custom_call.1}
  #allocation0 [shape = 'u32[]', space=smem, size = 0x4, offset = 0x4, fixed_abs, tag = 'smem constant byte address 0x4 - core index']
  #allocation1 [shape = 'u32[144,128]{1,0:T(1,128)}', space=vmem, size = 0x12000, scoped, tag = 'internal scratch']
  %s0 = inlined_call_operand.hbm [shape: f32[8,128], index: 0, kind: input, shape index: {}]
  %s1 = inlined_call_operand.hbm [shape: bf16[128,128], index: 1, kind: input, shape index: {}]
  %s2 = inlined_call_operand.hbm [shape: bf16[128,128], index: 2, kind: input, shape index: {}]
  %s3 = inlined_call_operand.vmem [shape: f32[1,128], index: 3, kind: input, shape index: {}]
  %s4 = inlined_call_operand.vmem [shape: f32[1,128], index: 4, kind: input, shape index: {}]
  %s5 = inlined_call_operand.vmem [shape: f32[1,128], index: 5, kind: input, shape index: {}]
  %s6 = inlined_call_operand.vmem [shape: f32[1,128], index: 6, kind: input, shape index: {}]
  %s7 = inlined_call_operand.hbm [shape: f32[8,128], index: 7, kind: output, shape index: {}]
  %s8 = sld [smem:[#allocation0]]
  $region58: #{tpu_custom_call.1} parent=0
    _
  %s10 = ssub.s32 1, %s8
  %s11 = scalar_select 0, %s10, %s8
  $region1: #{tpu_custom_call.1} parent=0
    #allocation2 [shape = 'u8[4096]{0}', space=vmem, size = 0x1000, scoped, tag = 'input window, operand 0, single buffered']
    #allocation3 [shape = 's32[1]{0}', space=sflag, size = 0x4, scoped, tag = 'scoped memory for tpu_custom_call.1']
    #allocation4 [shape = 's32[1]{0}', space=sflag, size = 0x4, scoped, tag = 'scoped memory for tpu_custom_call.1']
    #allocation5 [shape = 'u8[32768]{0}', space=vmem, size = 0x8000, scoped, tag = 'input window, operand 1, single buffered']
    #allocation6 [shape = 's32[1]{0}', space=sflag, size = 0x4, scoped, tag = 'scoped memory for tpu_custom_call.1']
    #allocation7 [shape = 'u8[32768]{0}', space=vmem, size = 0x8000, scoped, tag = 'input window, operand 2, single buffered']
    #allocation8 [shape = 'u8[4096]{0}', space=vmem, size = 0x1000, scoped, tag = 'output window, operand 0, single buffered']
    %12 = vsyncpa [#allocation3], 0
    %13 = vsyncpa [#allocation6], 0
    %14 = vsyncpa [#allocation4], 0
    // Predicated region
    $region2: #{tpu_custom_call.1} parent=1 // pred_check
      _
    $region3: #{tpu_custom_call.1} parent=1 // pred_check_branch
      %16 = sbr.rel (0) target = $region5
    $region4: #{tpu_custom_call.1} parent=1 // pred_region
      %s18 = ssub.s32 128, 128
      %19 = vsyncadd [#allocation3], %s18
      %s21 = sshll.u32 [#allocation2], 4
      %s22 = int_to_ptr.vmem [resolvable:$true] %s21
      %24 = dma.hbm_to_vmem [thread:$0]  %s0, 128, %s22, [#allocation3]
    $region5: #{tpu_custom_call.1} parent=1 // pred_fallthru
      _
    // Predicated region
    $region6: #{tpu_custom_call.1} parent=1 // pred_check
      _
    $region7: #{tpu_custom_call.1} parent=1 // pred_check_branch
      %26 = sbr.rel (0) target = $region9
    $region8: #{tpu_custom_call.1} parent=1 // pred_region
      %s28 = ssub.s32 1024, 1024
      %29 = vsyncadd [#allocation6], %s28
      %s30 = sshll.u32 [#allocation5], 4
      %s31 = int_to_ptr.vmem [resolvable:$true] %s30
      %36 = dma.hbm_to_vmem [thread:$0]  %s1, 1024, %s31, [#allocation6], 64, 64, 4
    $region9: #{tpu_custom_call.1} parent=1 // pred_fallthru
      _
    // Predicated region
    $region10: #{tpu_custom_call.1} parent=1 // pred_check
      _
    $region11: #{tpu_custom_call.1} parent=1 // pred_check_branch
      %38 = sbr.rel (0) target = $region13
    $region12: #{tpu_custom_call.1} parent=1 // pred_region
      %s40 = ssub.s32 1024, 1024
      %41 = vsyncadd [#allocation6], %s40
      %s42 = sshll.u32 [#allocation7], 4
      %s43 = int_to_ptr.vmem [resolvable:$true] %s42
      %48 = dma.hbm_to_vmem [thread:$0]  %s2, 1024, %s43, [#allocation6], 64, 64, 4
    $region13: #{tpu_custom_call.1} parent=1 // pred_fallthru
      _
    // Predicated region
    $region14: #{tpu_custom_call.1} parent=1 // pred_check
      _
    $region15: #{tpu_custom_call.1} parent=1 // pred_check_branch
      %50 = sbr.rel (0) target = $region17
    $region16: #{tpu_custom_call.1} parent=1 // pred_region
      _
    $region17: #{tpu_custom_call.1} parent=1 // pred_fallthru
      _
    // Predicated region
    $region18: #{tpu_custom_call.1} parent=1 // pred_check
      _
    $region19: #{tpu_custom_call.1} parent=1 // pred_check_branch
      %52 = sbr.rel (0) target = $region21
    $region20: #{tpu_custom_call.1} parent=1 // pred_region
      _
    $region21: #{tpu_custom_call.1} parent=1 // pred_fallthru
      _
    // Predicated region
    $region22: #{tpu_custom_call.1} parent=1 // pred_check
      _
    $region23: #{tpu_custom_call.1} parent=1 // pred_check_branch
      %54 = sbr.rel (0) target = $region25
    $region24: #{tpu_custom_call.1} parent=1 // pred_region
      _
    $region25: #{tpu_custom_call.1} parent=1 // pred_fallthru
      _
    // Predicated region
    $region26: #{tpu_custom_call.1} parent=1 // pred_check
      _
    $region27: #{tpu_custom_call.1} parent=1 // pred_check_branch
      %56 = sbr.rel (0) target = $region29
    $region28: #{tpu_custom_call.1} parent=1 // pred_region
      _
    $region29: #{tpu_custom_call.1} parent=1 // pred_fallthru
      _
    // Predicated region
    $region30: #{tpu_custom_call.1} parent=1 // pred_check
      _
    $region31: #{tpu_custom_call.1} parent=1 // pred_check_branch
      %58 = sbr.rel (0) target = $region33
    $region32: #{tpu_custom_call.1} parent=1 // pred_region
      %59 = dma.done [#allocation3], 128
    $region33: #{tpu_custom_call.1} parent=1 // pred_fallthru
      _
    // Predicated region
    $region34: #{tpu_custom_call.1} parent=1 // pred_check
      _
    $region35: #{tpu_custom_call.1} parent=1 // pred_check_branch
      %61 = sbr.rel (0) target = $region37
    $region36: #{tpu_custom_call.1} parent=1 // pred_region
      %62 = dma.done [#allocation6], 1024
    $region37: #{tpu_custom_call.1} parent=1 // pred_fallthru
      _
    // Predicated region
    $region38: #{tpu_custom_call.1} parent=1 // pred_check
      _
    $region39: #{tpu_custom_call.1} parent=1 // pred_check_branch
      %64 = sbr.rel (0) target = $region41
    $region40: #{tpu_custom_call.1} parent=1 // pred_region
      %65 = dma.done [#allocation6], 1024
    $region41: #{tpu_custom_call.1} parent=1 // pred_fallthru
      _
    %p67 = scmp.eq.s32.totalorder 0, 0
    // Predicated region
    $region42: #{tpu_custom_call.1} parent=1 // pred_check
      %p68 = pneg %p67
    $region43: #{tpu_custom_call.1} parent=1 // pred_check_branch
      %70 = sbr.rel (%p68) target = $region45
    $region44: #{tpu_custom_call.1} parent=1 // pred_region
      %71 = vst [vmem:[#allocation8] sm:$0xff] 0.0
    $region45: #{tpu_custom_call.1} parent=1 // pred_fallthru
      _
    %s72 = smul.u32 0, 128
    %s73 = smul.u32 0, 128
    %s74 = sshra.s32 %s72, 7
    %s75 = sand.u32 %s72, 127
    %s76 = scalar_lea.vmem [#allocation2], %s74
    %v77 = vld [vmem:[%s76] sm:$0xff]
    %s78 = scalar_lea.vmem %s3, %s74
    %v79 = vld [vmem:[%s78] sm:$0x1]
    %s80 = sshra.s32 %s73, 7
    %s81 = sand.u32 %s73, 127
    %s82 = scalar_lea.vmem %s4, %s80
    %v83 = vld [vmem:[%s82] sm:$0x1]
    %v84 = vpack.c.bf16 %v77, %v77
    %v85 = vld [vmem:[#allocation5] sm:$0xf]
    %v86 = vld [vmem:[#allocation5 + $0x4] sm:$0xf]
    %v87 = vld [vmem:[#allocation5 + $0x8] sm:$0xf]
    %v88 = vld [vmem:[#allocation5 + $0xc] sm:$0xf]
    %v89 = vld [vmem:[#allocation5 + $0x10] sm:$0xf]
    %v90 = vld [vmem:[#allocation5 + $0x14] sm:$0xf]
    %v91 = vld [vmem:[#allocation5 + $0x18] sm:$0xf]
    %v92 = vld [vmem:[#allocation5 + $0x1c] sm:$0xf]
    %v93 = vld [vmem:[#allocation5 + $0x20] sm:$0xf]
    %v94 = vld [vmem:[#allocation5 + $0x24] sm:$0xf]
    %v95 = vld [vmem:[#allocation5 + $0x28] sm:$0xf]
    %v96 = vld [vmem:[#allocation5 + $0x2c] sm:$0xf]
    %v97 = vld [vmem:[#allocation5 + $0x30] sm:$0xf]
    %v98 = vld [vmem:[#allocation5 + $0x34] sm:$0xf]
    %v99 = vld [vmem:[#allocation5 + $0x38] sm:$0xf]
    %v100 = vld [vmem:[#allocation5 + $0x3c] sm:$0xf]
    %v102 = vlaneseq
    %v103 = vshrl.u32 %v102, 7
    %v104 = vsub.s32 0, %v103
    %v105 = vrot.slane %v79, %v104
    %v107 = vmul.f32 %v77, %v105
    %v108 = vpack.c.bf16 %v107, %v107
    %v109 = vld [vmem:[#allocation7] sm:$0xf]
    %v110 = vld [vmem:[#allocation7 + $0x4] sm:$0xf]
    %v111 = vld [vmem:[#allocation7 + $0x8] sm:$0xf]
    %v112 = vld [vmem:[#allocation7 + $0xc] sm:$0xf]
    %v113 = vld [vmem:[#allocation7 + $0x10] sm:$0xf]
    %v114 = vld [vmem:[#allocation7 + $0x14] sm:$0xf]
    %v115 = vld [vmem:[#allocation7 + $0x18] sm:$0xf]
    %v116 = vld [vmem:[#allocation7 + $0x1c] sm:$0xf]
    %v117 = vld [vmem:[#allocation7 + $0x20] sm:$0xf]
    %v118 = vld [vmem:[#allocation7 + $0x24] sm:$0xf]
    %v119 = vld [vmem:[#allocation7 + $0x28] sm:$0xf]
    %v120 = vld [vmem:[#allocation7 + $0x2c] sm:$0xf]
    %v121 = vld [vmem:[#allocation7 + $0x30] sm:$0xf]
    %v122 = vld [vmem:[#allocation7 + $0x34] sm:$0xf]
    %v123 = vld [vmem:[#allocation7 + $0x38] sm:$0xf]
    %v124 = vld [vmem:[#allocation7 + $0x3c] sm:$0xf]
    %v141 = vunpack.c.l.b16 %v109
    %v142 = vunpack.c.l.b16 %v110
    %v143 = vunpack.c.l.b16 %v111
    %v144 = vunpack.c.l.b16 %v112
    %v145 = vunpack.c.l.b16 %v113
    %v146 = vunpack.c.l.b16 %v114
    %v147 = vunpack.c.l.b16 %v115
    %v148 = vunpack.c.l.b16 %v116
    %v149 = vunpack.c.l.b16 %v117
    %v150 = vunpack.c.l.b16 %v118
    %v151 = vunpack.c.l.b16 %v119
    %v152 = vunpack.c.l.b16 %v120
    %v153 = vunpack.c.l.b16 %v121
    %v154 = vunpack.c.l.b16 %v122
    %v155 = vunpack.c.l.b16 %v123
    %v156 = vunpack.c.l.b16 %v124
    %v157 = vpack.c.b16 %v142, %v141
    %v158 = vpack.c.b16 %v144, %v143
    %v159 = vpack.c.b16 %v146, %v145
    %v160 = vpack.c.b16 %v148, %v147
    %v161 = vpack.c.b16 %v150, %v149
    %v162 = vpack.c.b16 %v152, %v151
    %v163 = vpack.c.b16 %v154, %v153
    %v164 = vpack.c.b16 %v156, %v155
    %173 = vmatprep.subr.bf16.mxu0 0
    %174 = vmatpush1.bf16.msra.mxu0 %v157
    %175 = vmatprep.subr.bf16.mxu0 0
    %176 = vmatpush1.bf16.msra.mxu0 %v158
    %177 = vmatprep.subr.bf16.mxu0 0
    %178 = vmatpush1.bf16.msra.mxu0 %v159
    %179 = vmatprep.subr.bf16.mxu0 0
    %180 = vmatpush1.bf16.msra.mxu0 %v160
    %181 = vmatprep.subr.bf16.mxu0 0
    %182 = vmatpush1.bf16.msra.mxu0 %v161
    %183 = vmatprep.subr.bf16.mxu0 0
    %184 = vmatpush1.bf16.msra.mxu0 %v162
    %185 = vmatprep.subr.bf16.mxu0 0
    %186 = vmatpush1.bf16.msra.mxu0 %v163
    %187 = vmatprep.subr.bf16.mxu0 0
    %188 = vmatpush1.bf16.msra.mxu0 %v164
    %189 = vmatprep.subr.bf16.mxu0 0
    %190 = vmatpush1.bf16.msra.mxu0 0
    %191 = vmatprep.subr.bf16.mxu0 0
    %192 = vmatpush1.bf16.msra.mxu0 0
    %193 = vmatprep.subr.bf16.mxu0 0
    %194 = vmatpush1.bf16.msra.mxu0 0
    %195 = vmatprep.subr.bf16.mxu0 0
    %196 = vmatpush1.bf16.msra.mxu0 0
    %197 = vmatprep.subr.bf16.mxu0 0
    %198 = vmatpush1.bf16.msra.mxu0 0
    %199 = vmatprep.subr.bf16.mxu0 0
    %200 = vmatpush1.bf16.msra.mxu0 0
    %201 = vmatprep.subr.bf16.mxu0 0
    %202 = vmatpush1.bf16.msra.mxu0 0
    %203 = vmatprep.subr.bf16.mxu0 0
    %204 = vmatpush1.bf16.msra.mxu0 0
    %205 = vmatprep.mubr.bf16.mxu0 0
    %206 = vmatmul.mubr.bf16.gmra.mrb[0].mxu0 %v108
    %v207 = vpop.f32.mrb[0].mxu0
    %v208 = vadd.f32 0.0, %v207
    %v209 = vpop.f32.mrb[0].mxu0
    %v210 = vpop.f32.mrb[0].mxu0
    %v211 = vpop.f32.mrb[0].mxu0
    %212 = vdwg.mxu0
    %v214 = vlaneseq
    %v215 = vshrl.u32 %v214, 7
    %v216 = vsub.s32 0, %v215
    %v217 = vrot.slane %v83, %v216
    %v219 = vmul.f32 %v217, %v208
    %v236 = vunpack.c.l.b16 %v85
    %v237 = vunpack.c.l.b16 %v86
    %v238 = vunpack.c.l.b16 %v87
    %v239 = vunpack.c.l.b16 %v88
    %v240 = vunpack.c.l.b16 %v89
    %v241 = vunpack.c.l.b16 %v90
    %v242 = vunpack.c.l.b16 %v91
    %v243 = vunpack.c.l.b16 %v92
    %v244 = vunpack.c.l.b16 %v93
    %v245 = vunpack.c.l.b16 %v94
    %v246 = vunpack.c.l.b16 %v95
    %v247 = vunpack.c.l.b16 %v96
    %v248 = vunpack.c.l.b16 %v97
    %v249 = vunpack.c.l.b16 %v98
    %v250 = vunpack.c.l.b16 %v99
    %v251 = vunpack.c.l.b16 %v100
    %v252 = vpack.c.b16 %v237, %v236
    %v253 = vpack.c.b16 %v239, %v238
    %v254 = vpack.c.b16 %v241, %v240
    %v255 = vpack.c.b16 %v243, %v242
    %v256 = vpack.c.b16 %v245, %v244
    %v257 = vpack.c.b16 %v247, %v246
    %v258 = vpack.c.b16 %v249, %v248
    %v259 = vpack.c.b16 %v251, %v250
    %268 = vmatprep.subr.bf16.mxu0 0
    %269 = vmatpush1.bf16.msra.mxu0 %v252
    %270 = vmatprep.subr.bf16.mxu0 0
    %271 = vmatpush1.bf16.msra.mxu0 %v253
    %272 = vmatprep.subr.bf16.mxu0 0
    %273 = vmatpush1.bf16.msra.mxu0 %v254
    %274 = vmatprep.subr.bf16.mxu0 0
    %275 = vmatpush1.bf16.msra.mxu0 %v255
    %276 = vmatprep.subr.bf16.mxu0 0
    %277 = vmatpush1.bf16.msra.mxu0 %v256
    %278 = vmatprep.subr.bf16.mxu0 0
    %279 = vmatpush1.bf16.msra.mxu0 %v257
    %280 = vmatprep.subr.bf16.mxu0 0
    %281 = vmatpush1.bf16.msra.mxu0 %v258
    %282 = vmatprep.subr.bf16.mxu0 0
    %283 = vmatpush1.bf16.msra.mxu0 %v259
    %284 = vmatprep.subr.bf16.mxu0 0
    %285 = vmatpush1.bf16.msra.mxu0 0
    %286 = vmatprep.subr.bf16.mxu0 0
    %287 = vmatpush1.bf16.msra.mxu0 0
    %288 = vmatprep.subr.bf16.mxu0 0
    %289 = vmatpush1.bf16.msra.mxu0 0
    %290 = vmatprep.subr.bf16.mxu0 0
    %291 = vmatpush1.bf16.msra.mxu0 0
    %292 = vmatprep.subr.bf16.mxu0 0
    %293 = vmatpush1.bf16.msra.mxu0 0
    %294 = vmatprep.subr.bf16.mxu0 0
    %295 = vmatpush1.bf16.msra.mxu0 0
    %296 = vmatprep.subr.bf16.mxu0 0
    %297 = vmatpush1.bf16.msra.mxu0 0
    %298 = vmatprep.subr.bf16.mxu0 0
    %299 = vmatpush1.bf16.msra.mxu0 0
    %300 = vmatprep.mubr.bf16.mxu0 0
    %301 = vmatmul.mubr.bf16.gmra.mrb[0].mxu0 %v84
    %v302 = vpop.f32.mrb[0].mxu0
    %v303 = vadd.f32 %v219, %v302
    %v304 = vpop.f32.mrb[0].mxu0
    %v305 = vpop.f32.mrb[0].mxu0
    %v306 = vpop.f32.mrb[0].mxu0
    %307 = vdwg.mxu0
    %v308 = vld [vmem:[#allocation8] sm:$0xff]
    %v309 = vadd.f32 %v308, %v303
    %310 = vst [vmem:[#allocation8] sm:$0xff] %v309
    // Predicated region
    $region46: #{tpu_custom_call.1} parent=1 // pred_check
      %p311 = pneg %p67
    $region47: #{tpu_custom_call.1} parent=1 // pred_check_branch
      %313 = sbr.rel (%p311) target = $region49
    $region48: #{tpu_custom_call.1} parent=1 // pred_region
      %s314 = scalar_lea.vmem %s5, %s80
      %v315 = vld [vmem:[%s314] sm:$0x1]
      %s316 = scalar_lea.vmem %s6, %s80
      %v317 = vld [vmem:[%s316] sm:$0x1]
      %v318 = vmul.f32 %v317, %v83
      %v319 = vadd.f32 %v315, %v318
      %v320 = vld [vmem:[#allocation8] sm:$0xff]
      %v322 = vlaneseq
      %v323 = vshrl.u32 %v322, 7
      %v324 = vsub.s32 0, %v323
      %v325 = vrot.slane %v319, %v324
      %v327 = vadd.f32 %v320, %v325
      %328 = vst [vmem:[#allocation8] sm:$0xff] %v327
    $region49: #{tpu_custom_call.1} parent=1 // pred_fallthru
      _
    // Predicated region
    $region50: #{tpu_custom_call.1} parent=1 // pred_check
      _
    $region51: #{tpu_custom_call.1} parent=1 // pred_check_branch
      %330 = sbr.rel (0) target = $region53
    $region52: #{tpu_custom_call.1} parent=1 // pred_region
      %s332 = ssub.s32 128, 128
      %333 = vsyncadd [#allocation4], %s332
      %s335 = sshll.u32 [#allocation8], 4
      %s336 = int_to_ptr.vmem [resolvable:$true] %s335
      %338 = dma.vmem_to_hbm [thread:$0]  %s336, 128, %s7, [#allocation4]
    $region53: #{tpu_custom_call.1} parent=1 // pred_fallthru
      _
    // Predicated region
    $region54: #{tpu_custom_call.1} parent=1 // pred_check
      _
    $region55: #{tpu_custom_call.1} parent=1 // pred_check_branch
      %340 = sbr.rel (0) target = $region57
    $region56: #{tpu_custom_call.1} parent=1 // pred_region
      %341 = dma.done [#allocation4], 128
    $region57: #{tpu_custom_call.1} parent=1 // pred_fallthru
      _
    %342 = vsyncpa [#allocation3], 1
    %343 = vsyncpa [#allocation6], 1
    %344 = vsyncpa [#allocation4], 1

</llo_original>
